<compile_context>
chip_gen: v7x
topology: tpu7x:2x2x1
jax: 0.10.0
libtpu: 0.0.40
codegen_flags: <defaults>
</compile_context>

<pallas_src>
import functools

import jax
import jax.numpy as jnp
from jax.experimental import pallas as pl
from jax.experimental.pallas import tpu as pltpu


def _add_kernel(a_ref, b_ref, o_ref):
    o_ref[...] = a_ref[...] + b_ref[...]


def _add_2d(a2, b2, *, alias):
    rows, lanes = a2.shape
    n = rows * lanes
    return pl.pallas_call(
        _add_kernel,
        out_shape=jax.ShapeDtypeStruct((rows, lanes), a2.dtype),
        in_specs=[
            pl.BlockSpec(memory_space=pltpu.MemorySpace.VMEM),
            pl.BlockSpec(memory_space=pltpu.MemorySpace.VMEM),
        ],
        out_specs=pl.BlockSpec(memory_space=pltpu.MemorySpace.VMEM),
        input_output_aliases={0: 0} if alias else {},
        cost_estimate=pl.CostEstimate(
            flops=n,
            transcendentals=0,
            bytes_accessed=3 * n * a2.dtype.itemsize,
        ),
    )(a2, b2)


@functools.partial(jax.jit, donate_argnums=(0,))
def pallas_add(a, b):
    """x588 = x587 + x572 as one gridless Pallas call (a's buffer donated)."""
    assert a.shape == b.shape and a.dtype == b.dtype
    orig_shape = a.shape
    n = a.size

    lanes = 128  # minimize sublane padding: 25088 -> (196,128), pads to (200,128)
    if n % lanes == 0:
        rows = n // lanes
        out2 = _add_2d(a.reshape(rows, lanes), b.reshape(rows, lanes), alias=True)
        return out2.reshape(orig_shape)

    # Padded fallback for arbitrary residual shapes (no alias: shapes differ).
    pad = (-n) % lanes
    rows = (n + pad) // lanes
    a2 = jnp.pad(a.reshape(-1), (0, pad)).reshape(rows, lanes)
    b2 = jnp.pad(b.reshape(-1), (0, pad)).reshape(rows, lanes)
    out2 = _add_2d(a2, b2, alias=False)
    return out2.reshape(-1)[:n].reshape(orig_shape)


if __name__ == "__main__":
    key = jax.random.PRNGKey(0)
    k1, k2 = jax.random.split(key)
    # Shapes implied by the module's forward: (1, 512, 7, 7) NCHW, f32.
    x587 = jax.random.normal(k1, (1, 512, 7, 7), dtype=jnp.float32)
    x572 = jax.random.normal(k2, (1, 512, 7, 7), dtype=jnp.float32)

    # Reference first: x587's device buffer is donated by the jitted call below.
    ref = jax.block_until_ready(x587 + x572)

    out = pallas_add(x587, x572)
    jax.block_until_ready(out)

    assert out.shape == ref.shape
    assert jnp.allclose(out, ref), "mismatch vs reference add"
    print("KERNEL_OK")
</pallas_src>

<mosaic_0001>
module attributes {stable_mosaic.version = 11 : i64} {
  func.func @_add_kernel(%arg0: memref<196x128xf32, #tpu.memory_space<vmem>>, %arg1: memref<196x128xf32, #tpu.memory_space<vmem>>, %arg2: memref<196x128xf32, #tpu.memory_space<vmem>>) attributes {dimension_semantics = [], scalar_prefetch = 0 : i64, scratch_operands = 0 : i64, tpu.core_type = #tpu.core_type<tc>} {
    %c0 = arith.constant 0 : index
    %c0_0 = arith.constant 0 : index
    %0 = vector.load %arg0[%c0, %c0_0] : memref<196x128xf32, #tpu.memory_space<vmem>>, vector<196x128xf32>
    %c0_1 = arith.constant 0 : index
    %c0_2 = arith.constant 0 : index
    %1 = vector.load %arg1[%c0_1, %c0_2] : memref<196x128xf32, #tpu.memory_space<vmem>>, vector<196x128xf32>
    %2 = arith.addf %0, %1 : vector<196x128xf32>
    %c0_3 = arith.constant 0 : index
    %c0_4 = arith.constant 0 : index
    %3 = vector.load %arg2[%c0_3, %c0_4] : memref<196x128xf32, #tpu.memory_space<vmem>>, vector<196x128xf32>
    tpu.vector_store %arg2[%c0_3, %c0_4], %2 {strides = array<i32>} : memref<196x128xf32, #tpu.memory_space<vmem>>, vector<196x128xf32>,
    return
  }
}

</mosaic_0001>

<llo_original>
// kernel: pallas_add.1
$region0: #{pallas_add.1}
  #allocation0 [shape = 'u32[]', space=smem, size = 0x4, offset = 0x4, fixed_abs, tag = 'smem constant byte address 0x4 - core index']
  #allocation1 [shape = 'u32[144,128]{1,0:T(1,128)}', space=vmem, size = 0x12000, scoped, tag = 'internal scratch']
  %s0 = inlined_call_operand.vmem [shape: f32[196,128], index: 0, kind: input, shape index: {}, may-alias: {0,2}]
  %s1 = inlined_call_operand.vmem [shape: f32[196,128], index: 1, kind: input, shape index: {}]
  %s2 = inlined_call_operand.vmem [shape: f32[196,128], index: 2, kind: output, shape index: {}, may-alias: {0,2}]
  %s3 = sld [smem:[#allocation0]]
  $region18: #{pallas_add.1} parent=0
    _
  %s5 = ssub.s32 1, %s3
  %s6 = scalar_select 0, %s5, %s3
  // Predicated region
  $region2: #{pallas_add.1} parent=0 // pred_check
    _
  $region3: #{pallas_add.1} parent=0 // pred_check_branch
    %8 = sbr.rel (0) target = $region5
  $region4: #{pallas_add.1} parent=0 // pred_region
    _
  $region5: #{pallas_add.1} parent=0 // pred_fallthru
    _
  // Predicated region
  $region6: #{pallas_add.1} parent=0 // pred_check
    _
  $region7: #{pallas_add.1} parent=0 // pred_check_branch
    %10 = sbr.rel (0) target = $region9
  $region8: #{pallas_add.1} parent=0 // pred_region
    _
  $region9: #{pallas_add.1} parent=0 // pred_fallthru
    _
  %v11 = vld [vmem:[%s0] sm:$0xff]
  %v12 = vld [vmem:[%s0 + $0x8] sm:$0xff]
  %v13 = vld [vmem:[%s0 + $0x10] sm:$0xff]
  %v14 = vld [vmem:[%s0 + $0x18] sm:$0xff]
  %v15 = vld [vmem:[%s0 + $0x20] sm:$0xff]
  %v16 = vld [vmem:[%s0 + $0x28] sm:$0xff]
  %v17 = vld [vmem:[%s0 + $0x30] sm:$0xff]
  %v18 = vld [vmem:[%s0 + $0x38] sm:$0xff]
  %v19 = vld [vmem:[%s0 + $0x40] sm:$0xff]
  %v20 = vld [vmem:[%s0 + $0x48] sm:$0xff]
  %v21 = vld [vmem:[%s0 + $0x50] sm:$0xff]
  %v22 = vld [vmem:[%s0 + $0x58] sm:$0xff]
  %v23 = vld [vmem:[%s0 + $0x60] sm:$0xff]
  %v24 = vld [vmem:[%s0 + $0x68] sm:$0xff]
  %v25 = vld [vmem:[%s0 + $0x70] sm:$0xff]
  %v26 = vld [vmem:[%s0 + $0x78] sm:$0xff]
  %v27 = vld [vmem:[%s0 + $0x80] sm:$0xff]
  %v28 = vld [vmem:[%s0 + $0x88] sm:$0xff]
  %v29 = vld [vmem:[%s0 + $0x90] sm:$0xff]
  %v30 = vld [vmem:[%s0 + $0x98] sm:$0xff]
  %v31 = vld [vmem:[%s0 + $0xa0] sm:$0xff]
  %v32 = vld [vmem:[%s0 + $0xa8] sm:$0xff]
  %v33 = vld [vmem:[%s0 + $0xb0] sm:$0xff]
  %v34 = vld [vmem:[%s0 + $0xb8] sm:$0xff]
  %v35 = vld [vmem:[%s0 + $0xc0] sm:$0xf]
  %v36 = vld [vmem:[%s1] sm:$0xff]
  %v37 = vld [vmem:[%s1 + $0x8] sm:$0xff]
  %v38 = vld [vmem:[%s1 + $0x10] sm:$0xff]
  %v39 = vld [vmem:[%s1 + $0x18] sm:$0xff]
  %v40 = vld [vmem:[%s1 + $0x20] sm:$0xff]
  %v41 = vld [vmem:[%s1 + $0x28] sm:$0xff]
  %v42 = vld [vmem:[%s1 + $0x30] sm:$0xff]
  %v43 = vld [vmem:[%s1 + $0x38] sm:$0xff]
  %v44 = vld [vmem:[%s1 + $0x40] sm:$0xff]
  %v45 = vld [vmem:[%s1 + $0x48] sm:$0xff]
  %v46 = vld [vmem:[%s1 + $0x50] sm:$0xff]
  %v47 = vld [vmem:[%s1 + $0x58] sm:$0xff]
  %v48 = vld [vmem:[%s1 + $0x60] sm:$0xff]
  %v49 = vld [vmem:[%s1 + $0x68] sm:$0xff]
  %v50 = vld [vmem:[%s1 + $0x70] sm:$0xff]
  %v51 = vld [vmem:[%s1 + $0x78] sm:$0xff]
  %v52 = vld [vmem:[%s1 + $0x80] sm:$0xff]
  %v53 = vld [vmem:[%s1 + $0x88] sm:$0xff]
  %v54 = vld [vmem:[%s1 + $0x90] sm:$0xff]
  %v55 = vld [vmem:[%s1 + $0x98] sm:$0xff]
  %v56 = vld [vmem:[%s1 + $0xa0] sm:$0xff]
  %v57 = vld [vmem:[%s1 + $0xa8] sm:$0xff]
  %v58 = vld [vmem:[%s1 + $0xb0] sm:$0xff]
  %v59 = vld [vmem:[%s1 + $0xb8] sm:$0xff]
  %v60 = vld [vmem:[%s1 + $0xc0] sm:$0xf]
  %v61 = vadd.f32 %v11, %v36
  %v62 = vadd.f32 %v12, %v37
  %v63 = vadd.f32 %v13, %v38
  %v64 = vadd.f32 %v14, %v39
  %v65 = vadd.f32 %v15, %v40
  %v66 = vadd.f32 %v16, %v41
  %v67 = vadd.f32 %v17, %v42
  %v68 = vadd.f32 %v18, %v43
  %v69 = vadd.f32 %v19, %v44
  %v70 = vadd.f32 %v20, %v45
  %v71 = vadd.f32 %v21, %v46
  %v72 = vadd.f32 %v22, %v47
  %v73 = vadd.f32 %v23, %v48
  %v74 = vadd.f32 %v24, %v49
  %v75 = vadd.f32 %v25, %v50
  %v76 = vadd.f32 %v26, %v51
  %v77 = vadd.f32 %v27, %v52
  %v78 = vadd.f32 %v28, %v53
  %v79 = vadd.f32 %v29, %v54
  %v80 = vadd.f32 %v30, %v55
  %v81 = vadd.f32 %v31, %v56
  %v82 = vadd.f32 %v32, %v57
  %v83 = vadd.f32 %v33, %v58
  %v84 = vadd.f32 %v34, %v59
  %v85 = vadd.f32 %v35, %v60
  %86 = vst [vmem:[%s2] sm:$0xff] %v61
  %87 = vst [vmem:[%s2 + $0x8] sm:$0xff] %v62
  %88 = vst [vmem:[%s2 + $0x10] sm:$0xff] %v63
  %89 = vst [vmem:[%s2 + $0x18] sm:$0xff] %v64
  %90 = vst [vmem:[%s2 + $0x20] sm:$0xff] %v65
  %91 = vst [vmem:[%s2 + $0x28] sm:$0xff] %v66
  %92 = vst [vmem:[%s2 + $0x30] sm:$0xff] %v67
  %93 = vst [vmem:[%s2 + $0x38] sm:$0xff] %v68
  %94 = vst [vmem:[%s2 + $0x40] sm:$0xff] %v69
  %95 = vst [vmem:[%s2 + $0x48] sm:$0xff] %v70
  %96 = vst [vmem:[%s2 + $0x50] sm:$0xff] %v71
  %97 = vst [vmem:[%s2 + $0x58] sm:$0xff] %v72
  %98 = vst [vmem:[%s2 + $0x60] sm:$0xff] %v73
  %99 = vst [vmem:[%s2 + $0x68] sm:$0xff] %v74
  %100 = vst [vmem:[%s2 + $0x70] sm:$0xff] %v75
  %101 = vst [vmem:[%s2 + $0x78] sm:$0xff] %v76
  %102 = vst [vmem:[%s2 + $0x80] sm:$0xff] %v77
  %103 = vst [vmem:[%s2 + $0x88] sm:$0xff] %v78
  %104 = vst [vmem:[%s2 + $0x90] sm:$0xff] %v79
  %105 = vst [vmem:[%s2 + $0x98] sm:$0xff] %v80
  %106 = vst [vmem:[%s2 + $0xa0] sm:$0xff] %v81
  %107 = vst [vmem:[%s2 + $0xa8] sm:$0xff] %v82
  %108 = vst [vmem:[%s2 + $0xb0] sm:$0xff] %v83
  %109 = vst [vmem:[%s2 + $0xb8] sm:$0xff] %v84
  %110 = vst [vmem:[%s2 + $0xc0] sm:$0xf] %v85
  // Predicated region
  $region10: #{pallas_add.1} parent=0 // pred_check
    _
  $region11: #{pallas_add.1} parent=0 // pred_check_branch
    %112 = sbr.rel (0) target = $region13
  $region12: #{pallas_add.1} parent=0 // pred_region
    _
  $region13: #{pallas_add.1} parent=0 // pred_fallthru
    _
  // Predicated region
  $region14: #{pallas_add.1} parent=0 // pred_check
    _
  $region15: #{pallas_add.1} parent=0 // pred_check_branch
    %114 = sbr.rel (0) target = $region17
  $region16: #{pallas_add.1} parent=0 // pred_region
    _
  $region17: #{pallas_add.1} parent=0 // pred_fallthru
    _

</llo_original>
